<compile_context>
chip_gen: v7x
topology: tpu7x:2x2x1
jax: 0.10.0
libtpu: 0.0.40
codegen_flags: <defaults>
</compile_context>

<pallas_src>
import jax
import jax.numpy as jnp
from jax import lax
from jax.experimental import pallas as pl
from jax.experimental.pallas import tpu as pltpu

KH = KW = 4
STRIDE = 2
PAD = 1
BN_EPS = 1e-5
LANE = 128
SUBL = 8


def _round_up(x, m):
    return (x + m - 1) // m * m


def _vmem_capacity():
    try:
        cap = int(getattr(pltpu.get_tpu_info(), "vmem_capacity_bytes", 0) or 0)
        if cap > 0:
            return cap
    except Exception:
        pass
    return 64 * 1024 * 1024          # conservative (v7x per-TC physical)


# ------------------------------ kernels --------------------------------------


def _make_stats_kernel(*, tm, m_rows, tiles_per_core, store_y):
    """Pass 1: conv-as-matmul per M tile; per-core channel sum / shifted ssq.

    Per core (8-sublane row block): sum(y), sum((y - c)^2) and c, where c is
    the per-channel mean of that core's first tile (shifted sum-of-squares).
    Optionally also streams y to HBM in bf16.
    """

    def kernel(p_ref, w_ref, *out_refs):
        if store_y:
            y_ref, sum_ref, q_ref, cshift_ref = out_refs
        else:
            sum_ref, q_ref, cshift_ref = out_refs

        c = pl.program_id(0)
        i = pl.program_id(1)
        t = c * tiles_per_core + i

        y = jnp.dot(p_ref[...], w_ref[...], preferred_element_type=jnp.float32)
        if store_y:
            y_ref[...] = y.astype(y_ref.dtype)

        # Mask rows past the true M (ragged last tile -> padded garbage reads).
        n_valid = jnp.minimum(m_rows - t * tm, tm)
        rows = lax.broadcasted_iota(jnp.int32, (tm, 1), 0)
        mask = rows < n_valid
        ym = jnp.where(mask, y, 0.0)

        @pl.when(i == 0)
        def _():
            sum_ref[...] = jnp.zeros_like(sum_ref)
            q_ref[...] = jnp.zeros_like(q_ref)
            cshift_ref[...] = jnp.zeros_like(cshift_ref)
            cshift_ref[0:1, :] = (jnp.sum(ym, axis=0, keepdims=True)
                                  / n_valid.astype(jnp.float32))

        csh = cshift_ref[0:1, :]
        d = jnp.where(mask, y - csh, 0.0)
        sum_ref[0:1, :] += jnp.sum(ym, axis=0, keepdims=True)
        q_ref[0:1, :] += jnp.sum(d * d, axis=0, keepdims=True)

    return kernel


def _make_apply_recompute_kernel(act):
    """Pass 2 (small-K path): recompute conv, fused folded-BN + activation."""

    def kernel(p_ref, w_ref, scale_ref, bshift_ref, o_ref):
        y = jnp.dot(p_ref[...], w_ref[...], preferred_element_type=jnp.float32)
        z = y * scale_ref[...] + bshift_ref[...]
        z = jnp.maximum(z, 0.0) if act == 'relu' else jnp.where(z >= 0.0, z, 0.2 * z)
        o_ref[...] = z.astype(o_ref.dtype)

    return kernel


def _make_apply_elementwise_kernel(act):
    """Pass 2 (large-K path): elementwise folded-BN + activation over stored y."""

    def kernel(y_ref, scale_ref, bshift_ref, o_ref):
        z = y_ref[...].astype(jnp.float32) * scale_ref[...] + bshift_ref[...]
        z = jnp.maximum(z, 0.0) if act == 'relu' else jnp.where(z >= 0.0, z, 0.2 * z)
        o_ref[...] = z.astype(o_ref.dtype)

    return kernel


# ------------------------------ wrapper ---------------------------------------


def _im2col_reflect(x_bf16):
    """x: (N, Cin, H, W) bf16 -> patches (N*Ho*Wo, Cin*16) bf16 (NHWC rows)."""
    n, cin, h, w = x_bf16.shape
    xp = jnp.pad(x_bf16, ((0, 0), (0, 0), (PAD, PAD), (PAD, PAD)), mode='reflect')
    ho = (h + 2 * PAD - KH) // STRIDE + 1
    wo = (w + 2 * PAD - KW) // STRIDE + 1
    taps = []
    for kh in range(KH):
        for kw in range(KW):
            taps.append(xp[:, :, kh:kh + STRIDE * ho:STRIDE,
                              kw:kw + STRIDE * wo:STRIDE])     # (N, Cin, Ho, Wo)
    p = jnp.stack(taps, axis=-1)                 # (N, Cin, Ho, Wo, 16)
    p = jnp.transpose(p, (0, 2, 3, 1, 4))        # (N, Ho, Wo, Cin, 16)
    return p.reshape(n * ho * wo, cin * KH * KW), ho, wo


def _pick_tile_m(m_rows, k, cp, out_bytes, store_y, vmem_cap):
    budget = (vmem_cap * 3) // 4                            # compiler headroom
    fixed = 2 * k * cp * 2 + 8 * SUBL * cp * 4              # weight dbl-buf + stat blocks
    avail = max(budget - fixed, 1 << 20)
    per_row_p1 = 2 * k * 2 + (2 * cp * 2 if store_y else 0)
    per_row_p2 = (2 * cp * 2 if store_y else 2 * k * 2) + 2 * cp * out_bytes
    per_row = max(per_row_p1, per_row_p2)
    tm = avail // per_row
    tm = max(16, min(tm, 4096, _round_up(m_rows, 16)))
    return (tm // 16) * 16


def _vmem_limit(tm, k, cp, out_bytes, store_y, vmem_cap):
    p1 = (2 * tm * k * 2 + 2 * k * cp * 2
          + (2 * tm * cp * 2 if store_y else 0) + 6 * SUBL * cp * 4)
    p2 = ((2 * tm * cp * 2 if store_y else 2 * tm * k * 2 + 2 * k * cp * 2)
          + 2 * tm * cp * out_bytes + 4 * cp * 4)
    need = max(p1, p2)
    return int(min(max(need + (need >> 2) + (2 << 20), 16 << 20),
                   (vmem_cap * 7) // 8))


def block_forward(x, weight, gamma, beta, *, act='relu', use_dropout=False,
                  down=True, out_dtype=jnp.float32, out_layout='NCHW',
                  tile_m=None):
    """x: (N, Cin, H, W), weight: (Cout, Cin, 4, 4), gamma/beta: (Cout,).
    Returns (N, Cout, H//2, W//2) (or NHWC if out_layout='NHWC')."""
    if not down:
        # TODO(synk): ConvTranspose2d (down=False) path not implemented.
        raise NotImplementedError("down=False (ConvTranspose2d) not implemented")
    if use_dropout:
        # TODO(synk): training-mode Dropout(0.5) needs pltpu.prng_seed /
        # prng_random_bits fused into pass 2; module default is False.
        raise NotImplementedError("use_dropout=True not implemented")

    n, cin, h, w = x.shape
    cout = weight.shape[0]
    k = cin * KH * KW
    cp = _round_up(cout, LANE)
    out_bytes = 2 if out_dtype in (jnp.bfloat16, jnp.float16) else 4

    patches, ho, wo = _im2col_reflect(x.astype(jnp.bfloat16))
    m = n * ho * wo

    # Deep layers: stream y (bf16) from pass 1 instead of recomputing the conv
    # in pass 2 (y write+read = 4*Cp B/row < patch re-read = 2*K B/row).
    store_y = k > 2 * cp

    vmem_cap = _vmem_capacity()
    tm = tile_m if tile_m is not None else _pick_tile_m(m, k, cp, out_bytes,
                                                        store_y, vmem_cap)
    tm = max(16, (int(tm) // 16) * 16)
    n_tiles = (m + tm - 1) // tm
    m_pad = n_tiles * tm                # only OUTPUTS are row-padded (cheap)
    split = 2 if (n_tiles % 2 == 0 and n_tiles >= 2) else 1
    tiles_per_core = n_tiles // split
    vmem_limit = _vmem_limit(tm, k, cp, out_bytes, store_y, vmem_cap)

    # Weights: (Cout, Cin, 4, 4) -> (K, Cp), zero-padded lanes, bf16.
    w2d = weight.astype(jnp.float32).reshape(cout, k).T
    w2d = jnp.pad(w2d, ((0, 0), (0, cp - cout))).astype(jnp.bfloat16)

    mm_flops = 2 * m_pad * k * cp

    # ---------------- Pass 1: conv + per-core batch stats (+ y) --------------
    stats_kernel = _make_stats_kernel(tm=tm, m_rows=m,
                                      tiles_per_core=tiles_per_core,
                                      store_y=store_y)
    stat_shape = jax.ShapeDtypeStruct((split * SUBL, cp), jnp.float32)
    stat_spec = pl.BlockSpec((SUBL, cp), lambda c, i: (c, 0))
    p_spec = pl.BlockSpec((tm, k), lambda c, i: (c * tiles_per_core + i, 0))
    w_spec = pl.BlockSpec((k, cp), lambda c, i: (0, 0))

    out_shape1, out_specs1 = [], []
    if store_y:
        out_shape1.append(jax.ShapeDtypeStruct((m_pad, cp), jnp.bfloat16))
        out_specs1.append(
            pl.BlockSpec((tm, cp), lambda c, i: (c * tiles_per_core + i, 0)))
    out_shape1 += [stat_shape, stat_shape, stat_shape]
    out_specs1 += [stat_spec, stat_spec, stat_spec]

    bytes1 = (m * k * 2 + k * cp * 2 + 3 * split * SUBL * cp * 4
              + (m_pad * cp * 2 if store_y else 0))
    res1 = pl.pallas_call(
        stats_kernel,
        out_shape=tuple(out_shape1),
        grid=(split, tiles_per_core),
        in_specs=[p_spec, w_spec],
        out_specs=tuple(out_specs1),
        compiler_params=pltpu.CompilerParams(
            dimension_semantics=("parallel", "arbitrary"),
            vmem_limit_bytes=vmem_limit),
        cost_estimate=pl.CostEstimate(flops=mm_flops + 6 * m_pad * cp,
                                      transcendentals=0,
                                      bytes_accessed=bytes1),
    )(patches, w2d)

    if store_y:
        y_bf16, sums, qs, cshifts = res1
    else:
        sums, qs, cshifts = res1
        y_bf16 = None

    S = sums[0::SUBL, :]        # (split, cp)
    Q = qs[0::SUBL, :]
    C = cshifts[0::SUBL, :]

    # Chan et al. merge of per-core shifted moments -> global mean / var.
    rows_per_core = [min(m, (c + 1) * tiles_per_core * tm) - c * tiles_per_core * tm
                     for c in range(split)]
    mean_tot = M2_tot = None
    n_tot = 0.0
    for c in range(split):
        n_c = float(rows_per_core[c])
        mean_c = S[c:c + 1] / n_c
        M2_c = Q[c:c + 1] - n_c * (mean_c - C[c:c + 1]) ** 2
        if mean_tot is None:
            mean_tot, M2_tot, n_tot = mean_c, M2_c, n_c
        else:
            delta = mean_c - mean_tot
            n_new = n_tot + n_c
            M2_tot = M2_tot + M2_c + delta * delta * (n_tot * n_c / n_new)
            mean_tot = mean_tot + delta * (n_c / n_new)
            n_tot = n_new
    mean = mean_tot
    var = jnp.maximum(M2_tot / n_tot, 0.0)

    # Fold BN (training-mode, biased variance) + affine into one scale/shift.
    # NOTE: gamma is ZERO-padded so padded Cout lanes get scale = 0 even though
    # rsqrt(0 + eps) is large; don't change this padding to ones.
    inv = lax.rsqrt(var + BN_EPS)
    gamma_p = jnp.pad(gamma.astype(jnp.float32), (0, cp - cout)).reshape(1, cp)
    beta_p = jnp.pad(beta.astype(jnp.float32), (0, cp - cout)).reshape(1, cp)
    scale = gamma_p * inv
    bshift = beta_p - mean * scale

    # ---------------- Pass 2: folded BN + activation --------------------------
    sb_spec = pl.BlockSpec((1, cp), lambda i: (0, 0))
    o_spec = pl.BlockSpec((tm, cp), lambda i: (i, 0))
    if store_y:
        kern2 = _make_apply_elementwise_kernel(act)
        in2 = [pl.BlockSpec((tm, cp), lambda i: (i, 0)), sb_spec, sb_spec]
        args2 = (y_bf16, scale, bshift)
        bytes2 = m_pad * cp * (2 + out_bytes) + 2 * cp * 4
        flops2 = 3 * m_pad * cp
    else:
        kern2 = _make_apply_recompute_kernel(act)
        in2 = [pl.BlockSpec((tm, k), lambda i: (i, 0)),
               pl.BlockSpec((k, cp), lambda i: (0, 0)), sb_spec, sb_spec]
        args2 = (patches, w2d, scale, bshift)
        bytes2 = m * k * 2 + k * cp * 2 + m_pad * cp * out_bytes + 2 * cp * 4
        flops2 = mm_flops + 3 * m_pad * cp

    out2d = pl.pallas_call(
        kern2,
        out_shape=jax.ShapeDtypeStruct((m_pad, cp), out_dtype),
        grid=(n_tiles,),
        in_specs=in2,
        out_specs=o_spec,
        compiler_params=pltpu.CompilerParams(
            dimension_semantics=("parallel",),
            vmem_limit_bytes=vmem_limit),
        cost_estimate=pl.CostEstimate(flops=flops2, transcendentals=0,
                                      bytes_accessed=bytes2),
    )(*args2)

    out = out2d[:m, :cout].reshape(n, ho, wo, cout)
    if out_layout == 'NHWC':
        return out
    # TODO(synk): in a chained UNet keep NHWC end-to-end and skip this transpose.
    return out.transpose(0, 3, 1, 2)


# ------------------------------ reference / test ------------------------------


def _reference(x, weight, gamma, beta, act='relu'):
    # Same precision policy as the kernel: bf16 conv operands, f32 accumulate,
    # f32 batch-norm / affine / activation.
    xp = jnp.pad(x.astype(jnp.float32), ((0, 0), (0, 0), (PAD, PAD), (PAD, PAD)),
                 mode='reflect')
    y = lax.conv_general_dilated(
        xp.astype(jnp.bfloat16), weight.astype(jnp.bfloat16),
        window_strides=(STRIDE, STRIDE), padding='VALID',
        dimension_numbers=('NCHW', 'OIHW', 'NCHW'),
        preferred_element_type=jnp.float32)
    mean = jnp.mean(y, axis=(0, 2, 3), keepdims=True)
    var = jnp.mean((y - mean) ** 2, axis=(0, 2, 3), keepdims=True)
    yb = (y - mean) * lax.rsqrt(var + BN_EPS)
    yb = yb * gamma.reshape(1, -1, 1, 1) + beta.reshape(1, -1, 1, 1)
    return jnp.maximum(yb, 0.0) if act == 'relu' else jnp.where(yb >= 0.0, yb, 0.2 * yb)


if __name__ == "__main__":
    key = jax.random.PRNGKey(0)
    k1, k2, k3, k4 = jax.random.split(key, 4)

    # --- case 1: small Block (recompute path, single tile) --------------------
    N, CIN, COUT, H, W = 2, 4, 8, 16, 16
    x = jax.random.normal(k1, (N, CIN, H, W), dtype=jnp.float32)
    wgt = jax.random.normal(k2, (COUT, CIN, KH, KW),
                            dtype=jnp.float32) / jnp.sqrt(CIN * KH * KW)
    gamma = jnp.abs(jax.random.normal(k3, (COUT,), dtype=jnp.float32)) + 0.5
    beta = 0.1 * jax.random.normal(k4, (COUT,), dtype=jnp.float32)

    out = jax.block_until_ready(block_forward(x, wgt, gamma, beta, act='relu'))
    ref = _reference(x, wgt, gamma, beta, act='relu')
    assert out.shape == (N, COUT, H // 2, W // 2), out.shape
    err1 = float(jnp.max(jnp.abs(out - ref)))
    assert jnp.allclose(out, ref, atol=7e-3, rtol=7e-3), f"case1 err={err1}"

    # --- case 2: deeper Block (stored-y path, 2-core split, ragged last tile) -
    N2, CIN2, COUT2, H2, W2 = 2, 40, 8, 30, 30
    x2 = jax.random.normal(k2, (N2, CIN2, H2, W2), dtype=jnp.float32)
    wgt2 = jax.random.normal(k3, (COUT2, CIN2, KH, KW),
                             dtype=jnp.float32) / jnp.sqrt(CIN2 * KH * KW)
    gamma2 = jnp.abs(jax.random.normal(k4, (COUT2,), dtype=jnp.float32)) + 0.5
    beta2 = 0.1 * jax.random.normal(k1, (COUT2,), dtype=jnp.float32)

    out2 = jax.block_until_ready(
        block_forward(x2, wgt2, gamma2, beta2, act='leaky', tile_m=128))
    ref2 = _reference(x2, wgt2, gamma2, beta2, act='leaky')
    assert out2.shape == (N2, COUT2, H2 // 2, W2 // 2), out2.shape
    err2 = float(jnp.max(jnp.abs(out2 - ref2)))
    assert jnp.allclose(out2, ref2, atol=1e-2, rtol=1e-2), f"case2 err={err2}"

    print("KERNEL_OK")
</pallas_src>

<mosaic_0001>
module attributes {stable_mosaic.version = 11 : i64} {
  func.func @kernel(%arg0: i32, %arg1: i32, %arg2: memref<128x64xbf16, #tpu.memory_space<vmem>>, %arg3: memref<64x128xbf16, #tpu.memory_space<vmem>>, %arg4: memref<8x128xf32, #tpu.memory_space<vmem>>, %arg5: memref<8x128xf32, #tpu.memory_space<vmem>>, %arg6: memref<8x128xf32, #tpu.memory_space<vmem>>) attributes {dimension_semantics = [#tpu.dimension_semantics<parallel>, #tpu.dimension_semantics<arbitrary>], iteration_bounds = array<i64: 1, 1>, scalar_prefetch = 0 : i64, scratch_operands = 0 : i64, tpu.core_type = #tpu.core_type<tc>, window_params = [{transform_indices = @transform_0, window_bounds = array<i64: 128, 64>}, {pipeline_mode = #tpu.pipeline_mode<synchronous>, transform_indices = @transform_1, window_bounds = array<i64: 64, 128>}, {transform_indices = @transform_2, window_bounds = array<i64: 8, 128>}, {transform_indices = @transform_3, window_bounds = array<i64: 8, 128>}, {transform_indices = @transform_4, window_bounds = array<i64: 8, 128>}]} {
    %c1_i32 = arith.constant 1 : i32
    %0 = arith.muli %arg0, %c1_i32 : i32
    %1 = arith.addi %0, %arg1 : i32
    %c0 = arith.constant 0 : index
    %c0_0 = arith.constant 0 : index
    %2 = vector.load %arg2[%c0, %c0_0] : memref<128x64xbf16, #tpu.memory_space<vmem>>, vector<128x64xbf16>
    %c0_1 = arith.constant 0 : index
    %c0_2 = arith.constant 0 : index
    %3 = vector.load %arg3[%c0_1, %c0_2] : memref<64x128xbf16, #tpu.memory_space<vmem>>, vector<64x128xbf16>
    %cst = arith.constant dense<0.000000e+00> : vector<128x128xf32>
    %4 = tpu.matmul %2, %3, %cst {dimension_numbers = #tpu.dot_dimension_numbers<[1], [0], [0], [1], [0, 0, 1, 1], [], []>} : vector<128x64xbf16>, vector<64x128xbf16>, vector<128x128xf32> -> vector<128x128xf32>
    %c128_i32 = arith.constant 128 : i32
    %5 = arith.muli %1, %c128_i32 : i32
    %c128_i32_3 = arith.constant 128 : i32
    %6 = arith.subi %c128_i32_3, %5 : i32
    %c128_i32_4 = arith.constant 128 : i32
    %7 = arith.minsi %6, %c128_i32_4 : i32
    %8 = tpu.iota {dimensions = array<i32: 0>} : vector<128x1xi32>
    %9 = vector.broadcast %7 : i32 to vector<128x1xi32>
    %10 = arith.cmpi slt, %8, %9 : vector<128x1xi32>
    %cst_5 = arith.constant 0.000000e+00 : f32
    %11 = vector.shape_cast %10 : vector<128x1xi1> to vector<128x1xi1>
    %12 = vector.broadcast %11 : vector<128x1xi1> to vector<128x128xi1>
    %13 = vector.broadcast %cst_5 : f32 to vector<128x128xf32>
    %14 = arith.select %12, %4, %13 : vector<128x128xi1>, vector<128x128xf32>
    %c0_i32 = arith.constant 0 : i32
    %15 = arith.cmpi eq, %arg1, %c0_i32 : i32
    %16 = arith.extui %15 : i1 to i32
    %c0_i32_6 = arith.constant 0 : i32
    %17 = arith.cmpi ne, %16, %c0_i32_6 : i32
    scf.if %17 {
      %cst_20 = arith.constant 0.000000e+00 : f32
      %36 = vector.broadcast %cst_20 : f32 to vector<8x128xf32>
      %c0_21 = arith.constant 0 : index
      %c0_22 = arith.constant 0 : index
      %37 = vector.load %arg4[%c0_21, %c0_22] : memref<8x128xf32, #tpu.memory_space<vmem>>, vector<8x128xf32>
      tpu.vector_store %arg4[%c0_21, %c0_22], %36 {strides = array<i32>} : memref<8x128xf32, #tpu.memory_space<vmem>>, vector<8x128xf32>,
      %cst_23 = arith.constant 0.000000e+00 : f32
      %38 = vector.broadcast %cst_23 : f32 to vector<8x128xf32>
      %c0_24 = arith.constant 0 : index
      %c0_25 = arith.constant 0 : index
      %39 = vector.load %arg5[%c0_24, %c0_25] : memref<8x128xf32, #tpu.memory_space<vmem>>, vector<8x128xf32>
      tpu.vector_store %arg5[%c0_24, %c0_25], %38 {strides = array<i32>} : memref<8x128xf32, #tpu.memory_space<vmem>>, vector<8x128xf32>,
      %cst_26 = arith.constant 0.000000e+00 : f32
      %40 = vector.broadcast %cst_26 : f32 to vector<8x128xf32>
      %c0_27 = arith.constant 0 : index
      %c0_28 = arith.constant 0 : index
      %41 = vector.load %arg6[%c0_27, %c0_28] : memref<8x128xf32, #tpu.memory_space<vmem>>, vector<8x128xf32>
      tpu.vector_store %arg6[%c0_27, %c0_28], %40 {strides = array<i32>} : memref<8x128xf32, #tpu.memory_space<vmem>>, vector<8x128xf32>,
      %cst_29 = arith.constant dense<0.000000e+00> : vector<128xf32>
      %42 = vector.multi_reduction <add>, %14, %cst_29 [0] : vector<128x128xf32> to vector<128xf32>
      %43 = vector.shape_cast %42 : vector<128xf32> to vector<1x128xf32>
      %44 = arith.sitofp %7 : i32 to f32
      %45 = vector.broadcast %44 : f32 to vector<1x128xf32>
      %46 = arith.divf %43, %45 : vector<1x128xf32>
      %c0_30 = arith.constant 0 : index
      %c0_31 = arith.constant 0 : index
      %47 = vector.load %arg6[%c0_30, %c0_31] : memref<8x128xf32, #tpu.memory_space<vmem>>, vector<1x128xf32>
      tpu.vector_store %arg6[%c0_30, %c0_31], %46 {strides = array<i32>} : memref<8x128xf32, #tpu.memory_space<vmem>>, vector<1x128xf32>,
    } else {
    }
    %c0_7 = arith.constant 0 : index
    %c0_8 = arith.constant 0 : index
    %18 = vector.load %arg6[%c0_7, %c0_8] : memref<8x128xf32, #tpu.memory_space<vmem>>, vector<1x128xf32>
    %19 = vector.broadcast %18 : vector<1x128xf32> to vector<128x128xf32>
    %20 = arith.subf %4, %19 : vector<128x128xf32>
    %cst_9 = arith.constant 0.000000e+00 : f32
    %21 = vector.shape_cast %10 : vector<128x1xi1> to vector<128x1xi1>
    %22 = vector.broadcast %21 : vector<128x1xi1> to vector<128x128xi1>
    %23 = vector.broadcast %cst_9 : f32 to vector<128x128xf32>
    %24 = arith.select %22, %20, %23 : vector<128x128xi1>, vector<128x128xf32>
    %c0_10 = arith.constant 0 : index
    %c0_11 = arith.constant 0 : index
    %25 = vector.load %arg4[%c0_10, %c0_11] : memref<8x128xf32, #tpu.memory_space<vmem>>, vector<1x128xf32>
    %cst_12 = arith.constant dense<0.000000e+00> : vector<128xf32>
    %26 = vector.multi_reduction <add>, %14, %cst_12 [0] : vector<128x128xf32> to vector<128xf32>
    %27 = vector.shape_cast %26 : vector<128xf32> to vector<1x128xf32>
    %28 = arith.addf %25, %27 : vector<1x128xf32>
    %c0_13 = arith.constant 0 : index
    %c0_14 = arith.constant 0 : index
    %29 = vector.load %arg4[%c0_13, %c0_14] : memref<8x128xf32, #tpu.memory_space<vmem>>, vector<1x128xf32>
    tpu.vector_store %arg4[%c0_13, %c0_14], %28 {strides = array<i32>} : memref<8x128xf32, #tpu.memory_space<vmem>>, vector<1x128xf32>,
    %c0_15 = arith.constant 0 : index
    %c0_16 = arith.constant 0 : index
    %30 = vector.load %arg5[%c0_15, %c0_16] : memref<8x128xf32, #tpu.memory_space<vmem>>, vector<1x128xf32>
    %31 = arith.mulf %24, %24 : vector<128x128xf32>
    %cst_17 = arith.constant dense<0.000000e+00> : vector<128xf32>
    %32 = vector.multi_reduction <add>, %31, %cst_17 [0] : vector<128x128xf32> to vector<128xf32>
    %33 = vector.shape_cast %32 : vector<128xf32> to vector<1x128xf32>
    %34 = arith.addf %30, %33 : vector<1x128xf32>
    %c0_18 = arith.constant 0 : index
    %c0_19 = arith.constant 0 : index
    %35 = vector.load %arg5[%c0_18, %c0_19] : memref<8x128xf32, #tpu.memory_space<vmem>>, vector<1x128xf32>
    tpu.vector_store %arg5[%c0_18, %c0_19], %34 {strides = array<i32>} : memref<8x128xf32, #tpu.memory_space<vmem>>, vector<1x128xf32>,
    return
  }
  func.func @transform_0(%arg0: i32, %arg1: i32) -> (i32, i32) {
    %c1_i32 = arith.constant 1 : i32
    %0 = arith.muli %arg0, %c1_i32 : i32
    %1 = arith.addi %0, %arg1 : i32
    %c0_i32 = arith.constant 0 : i32
    %c0_i32_0 = arith.constant 0 : i32
    return %1, %c0_i32 : i32, i32
  }
  func.func @transform_1(%arg0: i32, %arg1: i32) -> (i32, i32) {
    %c0_i32 = arith.constant 0 : i32
    %c0_i32_0 = arith.constant 0 : i32
    %c0_i32_1 = arith.constant 0 : i32
    return %c0_i32, %c0_i32_0 : i32, i32
  }
  func.func @transform_2(%arg0: i32, %arg1: i32) -> (i32, i32) {
    %c0_i32 = arith.constant 0 : i32
    %c0_i32_0 = arith.constant 0 : i32
    return %arg0, %c0_i32 : i32, i32
  }
  func.func @transform_3(%arg0: i32, %arg1: i32) -> (i32, i32) {
    %c0_i32 = arith.constant 0 : i32
    %c0_i32_0 = arith.constant 0 : i32
    return %arg0, %c0_i32 : i32, i32
  }
  func.func @transform_4(%arg0: i32, %arg1: i32) -> (i32, i32) {
    %c0_i32 = arith.constant 0 : i32
    %c0_i32_0 = arith.constant 0 : i32
    return %arg0, %c0_i32 : i32, i32
  }
}

</mosaic_0001>

<llo_original>
// kernel: tpu_custom_call.1
$region0: #{tpu_custom_call.1}
  #allocation0 [shape = 'u32[]', space=smem, size = 0x4, offset = 0x4, fixed_abs, tag = 'smem constant byte address 0x4 - core index']
  #allocation1 [shape = 'u32[144,128]{1,0:T(1,128)}', space=vmem, size = 0x12000, scoped, tag = 'internal scratch']
  %s0 = inlined_call_operand.vmem [shape: bf16[128,64], index: 0, kind: input, shape index: {}]
  %s1 = inlined_call_operand.vmem [shape: bf16[64,128], index: 1, kind: input, shape index: {}]
  %s2 = inlined_call_operand.hbm [shape: f32[8,128], index: 2, kind: output, shape index: {0}]
  %s3 = inlined_call_operand.hbm [shape: f32[8,128], index: 3, kind: output, shape index: {1}]
  %s4 = inlined_call_operand.hbm [shape: f32[8,128], index: 4, kind: output, shape index: {2}]
  %5 = xla_tuple %s2, %s3, %s4
  %s6 = sld [smem:[#allocation0]]
  $region38: #{tpu_custom_call.1} parent=0
    _
  %s8 = ssub.s32 1, %s6
  %s9 = scalar_select 0, %s8, %s6
  $region1: #{tpu_custom_call.1} parent=0
    #allocation2 [shape = 'u8[4096]{0}', space=vmem, size = 0x1000, scoped, tag = 'output window, operand 0, single buffered']
    #allocation3 [shape = 's32[1]{0}', space=sflag, size = 0x4, scoped, tag = 'scoped memory for tpu_custom_call.1']
    #allocation4 [shape = 'u8[4096]{0}', space=vmem, size = 0x1000, scoped, tag = 'output window, operand 1, single buffered']
    #allocation5 [shape = 's32[1]{0}', space=sflag, size = 0x4, scoped, tag = 'scoped memory for tpu_custom_call.1']
    #allocation6 [shape = 'u8[4096]{0}', space=vmem, size = 0x1000, scoped, tag = 'output window, operand 2, single buffered']
    %10 = vsyncpa [#allocation3], 0
    %11 = vsyncpa [#allocation5], 0
    // Predicated region
    $region2: #{tpu_custom_call.1} parent=1 // pred_check
      _
    $region3: #{tpu_custom_call.1} parent=1 // pred_check_branch
      %13 = sbr.rel (0) target = $region5
    $region4: #{tpu_custom_call.1} parent=1 // pred_region
      %s14 = sadd.s32 0, 0
      %s15 = smul.u32 16, %s14
      %p16 = scmp.lt.s32.totalorder %s15, 15
      %s17 = scalar_select %p16, %s15, 15
      %s18 = smul.addr %s17, 4
      %s19 = scalar_lea.vmem %s0, %s18
      %s20 = sadd.s32 0, 0
      %s21 = smul.u32 16, %s20
    $region5: #{tpu_custom_call.1} parent=1 // pred_fallthru
      _
    // Predicated region
    $region6: #{tpu_custom_call.1} parent=1 // pred_check
      _
    $region7: #{tpu_custom_call.1} parent=1 // pred_check_branch
      %23 = sbr.rel (0) target = $region9
    $region8: #{tpu_custom_call.1} parent=1 // pred_region
      _
    $region9: #{tpu_custom_call.1} parent=1 // pred_fallthru
      _
    %s24 = sadd.s32 0, 0
    %s25 = smul.u32 16, %s24
    %p26 = scmp.lt.s32.totalorder %s25, 15
    %s27 = scalar_select %p26, %s25, 15
    %s28 = smul.addr %s27, 4
    %s29 = scalar_lea.vmem %s0, %s28
    %s30 = sadd.s32 0, 0
    %s31 = smul.u32 16, %s30
    %p32 = scmp.lt.s32.totalorder %s31, 15
    %s33 = scalar_select %p32, %s31, 15
    %s34 = smul.addr %s33, 4
    %s35 = scalar_lea.vmem %s0, %s34
    %s36 = sadd.s32 0, 0
    %s37 = smul.u32 16, %s36
    %s39 = sadd.s32 0, 0
    %v40 = vld [vmem:[%s35] sm:$0xf]
    %v41 = vld [vmem:[%s35 + $0x4] sm:$0xf]
    %v42 = vld [vmem:[%s35 + $0x8] sm:$0xf]
    %v43 = vld [vmem:[%s35 + $0xc] sm:$0xf]
    %v44 = vld [vmem:[%s35 + $0x10] sm:$0xf]
    %v45 = vld [vmem:[%s35 + $0x14] sm:$0xf]
    %v46 = vld [vmem:[%s35 + $0x18] sm:$0xf]
    %v47 = vld [vmem:[%s35 + $0x1c] sm:$0xf]
    %v48 = vld [vmem:[%s35 + $0x20] sm:$0xf]
    %v49 = vld [vmem:[%s35 + $0x24] sm:$0xf]
    %v50 = vld [vmem:[%s35 + $0x28] sm:$0xf]
    %v51 = vld [vmem:[%s35 + $0x2c] sm:$0xf]
    %v52 = vld [vmem:[%s35 + $0x30] sm:$0xf]
    %v53 = vld [vmem:[%s35 + $0x34] sm:$0xf]
    %v54 = vld [vmem:[%s35 + $0x38] sm:$0xf]
    %v55 = vld [vmem:[%s35 + $0x3c] sm:$0xf]
    %v56 = vld [vmem:[%s1] sm:$0xf]
    %v57 = vld [vmem:[%s1 + $0x4] sm:$0xf]
    %v58 = vld [vmem:[%s1 + $0x8] sm:$0xf]
    %v59 = vld [vmem:[%s1 + $0xc] sm:$0xf]
    %v60 = vld [vmem:[%s1 + $0x10] sm:$0xf]
    %v61 = vld [vmem:[%s1 + $0x14] sm:$0xf]
    %v62 = vld [vmem:[%s1 + $0x18] sm:$0xf]
    %v63 = vld [vmem:[%s1 + $0x1c] sm:$0xf]
    %v80 = vunpack.c.l.b16 %v40
    %v81 = vunpack.c.l.b16 %v41
    %v82 = vunpack.c.l.b16 %v42
    %v83 = vunpack.c.l.b16 %v43
    %v84 = vunpack.c.l.b16 %v44
    %v85 = vunpack.c.l.b16 %v45
    %v86 = vunpack.c.l.b16 %v46
    %v87 = vunpack.c.l.b16 %v47
    %v88 = vunpack.c.l.b16 %v48
    %v89 = vunpack.c.l.b16 %v49
    %v90 = vunpack.c.l.b16 %v50
    %v91 = vunpack.c.l.b16 %v51
    %v92 = vunpack.c.l.b16 %v52
    %v93 = vunpack.c.l.b16 %v53
    %v94 = vunpack.c.l.b16 %v54
    %v95 = vunpack.c.l.b16 %v55
    %v96 = vpack.c.b16 %v81, %v80
    %v97 = vpack.c.b16 %v83, %v82
    %v98 = vpack.c.b16 %v85, %v84
    %v99 = vpack.c.b16 %v87, %v86
    %v100 = vpack.c.b16 %v89, %v88
    %v101 = vpack.c.b16 %v91, %v90
    %v102 = vpack.c.b16 %v93, %v92
    %v103 = vpack.c.b16 %v95, %v94
    %v112 = vunpack.c.l.b16 %v56
    %v113 = vunpack.c.l.b16 %v57
    %v114 = vunpack.c.l.b16 %v58
    %v115 = vunpack.c.l.b16 %v59
    %v116 = vunpack.c.l.b16 %v60
    %v117 = vunpack.c.l.b16 %v61
    %v118 = vunpack.c.l.b16 %v62
    %v119 = vunpack.c.l.b16 %v63
    %v120 = vpack.c.b16 %v113, %v112
    %v121 = vpack.c.b16 %v115, %v114
    %v122 = vpack.c.b16 %v117, %v116
    %v123 = vpack.c.b16 %v119, %v118
    %vm128 = vcmask 523264
    %v130 = vsel %vm128, %v96, 0
    %v133 = vsel %vm128, %v97, 0
    %v136 = vsel %vm128, %v98, 0
    %v139 = vsel %vm128, %v99, 0
    %v142 = vsel %vm128, %v100, 0
    %v145 = vsel %vm128, %v101, 0
    %v148 = vsel %vm128, %v102, 0
    %v151 = vsel %vm128, %v103, 0
    %153 = vmatprep.subr.bf16.mxu0 0
    %154 = vmatpush1.bf16.msra.mxu0 %v120
    %155 = vmatprep.subr.bf16.mxu0 0
    %156 = vmatpush1.bf16.msra.mxu0 %v121
    %157 = vmatprep.subr.bf16.mxu0 0
    %158 = vmatpush1.bf16.msra.mxu0 %v122
    %159 = vmatprep.subr.bf16.mxu0 0
    %160 = vmatpush1.bf16.msra.mxu0 %v123
    %161 = vmatprep.subr.bf16.mxu0 0
    %162 = vmatpush1.bf16.msra.mxu0 0
    %163 = vmatprep.subr.bf16.mxu0 0
    %164 = vmatpush1.bf16.msra.mxu0 0
    %165 = vmatprep.subr.bf16.mxu0 0
    %166 = vmatpush1.bf16.msra.mxu0 0
    %167 = vmatprep.subr.bf16.mxu0 0
    %168 = vmatpush1.bf16.msra.mxu0 0
    %169 = vmatprep.subr.bf16.mxu0 0
    %170 = vmatpush1.bf16.msra.mxu0 0
    %171 = vmatprep.subr.bf16.mxu0 0
    %172 = vmatpush1.bf16.msra.mxu0 0
    %173 = vmatprep.subr.bf16.mxu0 0
    %174 = vmatpush1.bf16.msra.mxu0 0
    %175 = vmatprep.subr.bf16.mxu0 0
    %176 = vmatpush1.bf16.msra.mxu0 0
    %177 = vmatprep.subr.bf16.mxu0 0
    %178 = vmatpush1.bf16.msra.mxu0 0
    %179 = vmatprep.subr.bf16.mxu0 0
    %180 = vmatpush1.bf16.msra.mxu0 0
    %181 = vmatprep.subr.bf16.mxu0 0
    %182 = vmatpush1.bf16.msra.mxu0 0
    %183 = vmatprep.subr.bf16.mxu0 0
    %184 = vmatpush1.bf16.msra.mxu0 0
    %185 = vmatprep.mubr.bf16.mxu0 0
    %186 = vmatmul.mubr.bf16.gmra.mrb[0].mxu0 %v130
    %v187 = vpop.f32.mrb[0].mxu0
    %v188 = vadd.f32 0.0, %v187
    %v189 = vpop.f32.mrb[0].mxu0
    %v190 = vpop.f32.mrb[0].mxu0
    %v191 = vadd.f32 0.0, %v190
    %v192 = vpop.f32.mrb[0].mxu0
    %193 = vmatprep.mubr.bf16.mxu0 0
    %194 = vmatmul.mubr.bf16.gmra.mrb[0].mxu0 %v133
    %v195 = vpop.f32.mrb[0].mxu0
    %v196 = vadd.f32 0.0, %v195
    %v197 = vpop.f32.mrb[0].mxu0
    %v198 = vpop.f32.mrb[0].mxu0
    %v199 = vadd.f32 0.0, %v198
    %v200 = vpop.f32.mrb[0].mxu0
    %201 = vmatprep.mubr.bf16.mxu0 0
    %202 = vmatmul.mubr.bf16.gmra.mrb[0].mxu0 %v136
    %v203 = vpop.f32.mrb[0].mxu0
    %v204 = vadd.f32 0.0, %v203
    %v205 = vpop.f32.mrb[0].mxu0
    %v206 = vpop.f32.mrb[0].mxu0
    %v207 = vadd.f32 0.0, %v206
    %v208 = vpop.f32.mrb[0].mxu0
    %209 = vmatprep.mubr.bf16.mxu0 0
    %210 = vmatmul.mubr.bf16.gmra.mrb[0].mxu0 %v139
    %v211 = vpop.f32.mrb[0].mxu0
    %v212 = vadd.f32 0.0, %v211
    %v213 = vpop.f32.mrb[0].mxu0
    %v214 = vpop.f32.mrb[0].mxu0
    %v215 = vadd.f32 0.0, %v214
    %v216 = vpop.f32.mrb[0].mxu0
    %217 = vmatprep.mubr.bf16.mxu0 0
    %218 = vmatmul.mubr.bf16.gmra.mrb[0].mxu0 %v142
    %v219 = vpop.f32.mrb[0].mxu0
    %v220 = vadd.f32 0.0, %v219
    %v221 = vpop.f32.mrb[0].mxu0
    %v222 = vpop.f32.mrb[0].mxu0
    %v223 = vadd.f32 0.0, %v222
    %v224 = vpop.f32.mrb[0].mxu0
    %225 = vmatprep.mubr.bf16.mxu0 0
    %226 = vmatmul.mubr.bf16.gmra.mrb[0].mxu0 %v145
    %v227 = vpop.f32.mrb[0].mxu0
    %v228 = vadd.f32 0.0, %v227
    %v229 = vpop.f32.mrb[0].mxu0
    %v230 = vpop.f32.mrb[0].mxu0
    %v231 = vadd.f32 0.0, %v230
    %v232 = vpop.f32.mrb[0].mxu0
    %233 = vmatprep.mubr.bf16.mxu0 0
    %234 = vmatmul.mubr.bf16.gmra.mrb[0].mxu0 %v148
    %v235 = vpop.f32.mrb[0].mxu0
    %v236 = vadd.f32 0.0, %v235
    %v237 = vpop.f32.mrb[0].mxu0
    %v238 = vpop.f32.mrb[0].mxu0
    %v239 = vadd.f32 0.0, %v238
    %v240 = vpop.f32.mrb[0].mxu0
    %241 = vmatprep.mubr.bf16.mxu0 0
    %242 = vmatmul.mubr.bf16.gmra.mrb[0].mxu0 %v151
    %v243 = vpop.f32.mrb[0].mxu0
    %v244 = vadd.f32 0.0, %v243
    %v245 = vpop.f32.mrb[0].mxu0
    %v246 = vpop.f32.mrb[0].mxu0
    %v247 = vadd.f32 0.0, %v246
    %v248 = vpop.f32.mrb[0].mxu0
    %249 = vdwg.mxu0
    %s250 = smul.u32 %s39, 128
    %s251 = ssub.s32 128, %s250
    %p252 = scmp.lt.s32.totalorder %s251, 128
    %s253 = scalar_select %p252, %s251, 128
    %v254 = vlaneseq
    %v255 = vshrl.u32 %v254, 7
    %v256 = vadd.s32 %v255, 8
    %v257 = vadd.s32 %v255, 16
    %v258 = vadd.s32 %v255, 24
    %v259 = vadd.s32 %v255, 32
    %v260 = vadd.s32 %v255, 40
    %v261 = vadd.s32 %v255, 48
    %v262 = vadd.s32 %v255, 56
    %v263 = vadd.s32 %v255, 64
    %v264 = vadd.s32 %v255, 72
    %v265 = vadd.s32 %v255, 80
    %v266 = vadd.s32 %v255, 88
    %v267 = vadd.s32 %v255, 96
    %v268 = vadd.s32 %v255, 104
    %v269 = vadd.s32 %v255, 112
    %v270 = vadd.s32 %v255, 120
    %v271 = vstv %s253
    %vm272 = vcmp.lt.s32.totalorder %v255, %v271
    %vm273 = vcmp.lt.s32.totalorder %v256, %v271
    %vm274 = vcmp.lt.s32.totalorder %v257, %v271
    %vm275 = vcmp.lt.s32.totalorder %v258, %v271
    %vm276 = vcmp.lt.s32.totalorder %v259, %v271
    %vm277 = vcmp.lt.s32.totalorder %v260, %v271
    %vm278 = vcmp.lt.s32.totalorder %v261, %v271
    %vm279 = vcmp.lt.s32.totalorder %v262, %v271
    %vm280 = vcmp.lt.s32.totalorder %v263, %v271
    %vm281 = vcmp.lt.s32.totalorder %v264, %v271
    %vm282 = vcmp.lt.s32.totalorder %v265, %v271
    %vm283 = vcmp.lt.s32.totalorder %v266, %v271
    %vm284 = vcmp.lt.s32.totalorder %v267, %v271
    %vm285 = vcmp.lt.s32.totalorder %v268, %v271
    %vm286 = vcmp.lt.s32.totalorder %v269, %v271
    %vm287 = vcmp.lt.s32.totalorder %v270, %v271
    %v288 = vsel %vm272, 1, 0
    %v289 = vsel %vm273, 1, 0
    %v290 = vsel %vm274, 1, 0
    %v291 = vsel %vm275, 1, 0
    %v292 = vsel %vm276, 1, 0
    %v293 = vsel %vm277, 1, 0
    %v294 = vsel %vm278, 1, 0
    %v295 = vsel %vm279, 1, 0
    %v296 = vsel %vm280, 1, 0
    %v297 = vsel %vm281, 1, 0
    %v298 = vsel %vm282, 1, 0
    %v299 = vsel %vm283, 1, 0
    %v300 = vsel %vm284, 1, 0
    %v301 = vsel %vm285, 1, 0
    %v302 = vsel %vm286, 1, 0
    %v303 = vsel %vm287, 1, 0
    %vm304 = vcmp.eq.s32.totalorder %v288, 1
    %vm305 = vcmp.eq.s32.totalorder %v289, 1
    %vm306 = vcmp.eq.s32.totalorder %v290, 1
    %vm307 = vcmp.eq.s32.totalorder %v291, 1
    %vm308 = vcmp.eq.s32.totalorder %v292, 1
    %vm309 = vcmp.eq.s32.totalorder %v293, 1
    %vm310 = vcmp.eq.s32.totalorder %v294, 1
    %vm311 = vcmp.eq.s32.totalorder %v295, 1
    %vm312 = vcmp.eq.s32.totalorder %v296, 1
    %vm313 = vcmp.eq.s32.totalorder %v297, 1
    %vm314 = vcmp.eq.s32.totalorder %v298, 1
    %vm315 = vcmp.eq.s32.totalorder %v299, 1
    %vm316 = vcmp.eq.s32.totalorder %v300, 1
    %vm317 = vcmp.eq.s32.totalorder %v301, 1
    %vm318 = vcmp.eq.s32.totalorder %v302, 1
    %vm319 = vcmp.eq.s32.totalorder %v303, 1
    %v320 = vsel %vm304, %v188, 0.0
    %v321 = vsel %vm305, %v191, 0.0
    %v322 = vsel %vm306, %v196, 0.0
    %v323 = vsel %vm307, %v199, 0.0
    %v324 = vsel %vm308, %v204, 0.0
    %v325 = vsel %vm309, %v207, 0.0
    %v326 = vsel %vm310, %v212, 0.0
    %v327 = vsel %vm311, %v215, 0.0
    %v328 = vsel %vm312, %v220, 0.0
    %v329 = vsel %vm313, %v223, 0.0
    %v330 = vsel %vm314, %v228, 0.0
    %v331 = vsel %vm315, %v231, 0.0
    %v332 = vsel %vm316, %v236, 0.0
    %v333 = vsel %vm317, %v239, 0.0
    %v334 = vsel %vm318, %v244, 0.0
    %v335 = vsel %vm319, %v247, 0.0
    %p336 = scmp.eq.s32.totalorder 0, 0
    // Predicated region
    $region10: #{tpu_custom_call.1} parent=1 // pred_check
      %p337 = pneg %p336
    $region11: #{tpu_custom_call.1} parent=1 // pred_check_branch
      %339 = sbr.rel (%p337) target = $region13
    $region12: #{tpu_custom_call.1} parent=1 // pred_region
      %340 = vst [vmem:[#allocation2] sm:$0xff] 0.0
      %341 = vst [vmem:[#allocation4] sm:$0xff] 0.0
      %342 = vst [vmem:[#allocation6] sm:$0xff] 0.0
      %v343 = vadd.f32 %v320, %v321
      %v344 = vadd.f32 %v343, %v322
      %v345 = vadd.f32 %v344, %v323
      %v346 = vadd.f32 %v345, %v324
      %v347 = vadd.f32 %v346, %v325
      %v348 = vadd.f32 %v347, %v326
      %v349 = vadd.f32 %v348, %v327
      %v350 = vadd.f32 %v349, %v328
      %v351 = vadd.f32 %v350, %v329
      %v352 = vadd.f32 %v351, %v330
      %v353 = vadd.f32 %v352, %v331
      %v354 = vadd.f32 %v353, %v332
      %v355 = vadd.f32 %v354, %v333
      %v356 = vadd.f32 %v355, %v334
      %v357 = vadd.f32 %v356, %v335
      %v358 = vrot.slane %v357, 4
      %v359 = vadd.f32 %v357, %v358
      %v360 = vrot.slane %v359, 2
      %v361 = vadd.f32 %v359, %v360
      %v362 = vrot.slane %v361, 1
      %v363 = vadd.f32 %v361, %v362
      %s364 = scvt.s32.f32 %s253
      %v365 = vstv %s364
      %v366 = vrcp.pop %v365
      %v367 = vmul.f32 %v363, %v366
      %368 = vst [vmem:[#allocation6] sm:$0x1] %v367
    $region13: #{tpu_custom_call.1} parent=1 // pred_fallthru
      _
    %v369 = vld [vmem:[#allocation6] sm:$0x1]
    %v370 = vlaneseq
    %v371 = vshrl.u32 %v370, 7
    %v372 = vsub.s32 0, %v371
    %v373 = vrot.slane %v369, %v372
    %v374 = vsub.f32 %v188, %v373
    %v375 = vsub.f32 %v191, %v373
    %v376 = vsub.f32 %v196, %v373
    %v377 = vsub.f32 %v199, %v373
    %v378 = vsub.f32 %v204, %v373
    %v379 = vsub.f32 %v207, %v373
    %v380 = vsub.f32 %v212, %v373
    %v381 = vsub.f32 %v215, %v373
    %v382 = vsub.f32 %v220, %v373
    %v383 = vsub.f32 %v223, %v373
    %v384 = vsub.f32 %v228, %v373
    %v385 = vsub.f32 %v231, %v373
    %v386 = vsub.f32 %v236, %v373
    %v387 = vsub.f32 %v239, %v373
    %v388 = vsub.f32 %v244, %v373
    %v389 = vsub.f32 %v247, %v373
    %v390 = vsel %vm304, %v374, 0.0
    %v391 = vsel %vm305, %v375, 0.0
    %v392 = vsel %vm306, %v376, 0.0
    %v393 = vsel %vm307, %v377, 0.0
    %v394 = vsel %vm308, %v378, 0.0
    %v395 = vsel %vm309, %v379, 0.0
    %v396 = vsel %vm310, %v380, 0.0
    %v397 = vsel %vm311, %v381, 0.0
    %v398 = vsel %vm312, %v382, 0.0
    %v399 = vsel %vm313, %v383, 0.0
    %v400 = vsel %vm314, %v384, 0.0
    %v401 = vsel %vm315, %v385, 0.0
    %v402 = vsel %vm316, %v386, 0.0
    %v403 = vsel %vm317, %v387, 0.0
    %v404 = vsel %vm318, %v388, 0.0
    %v405 = vsel %vm319, %v389, 0.0
    %v406 = vld [vmem:[#allocation2] sm:$0x1]
    %v407 = vadd.f32 %v320, %v321
    %v408 = vadd.f32 %v407, %v322
    %v409 = vadd.f32 %v408, %v323
    %v410 = vadd.f32 %v409, %v324
    %v411 = vadd.f32 %v410, %v325
    %v412 = vadd.f32 %v411, %v326
    %v413 = vadd.f32 %v412, %v327
    %v414 = vadd.f32 %v413, %v328
    %v415 = vadd.f32 %v414, %v329
    %v416 = vadd.f32 %v415, %v330
    %v417 = vadd.f32 %v416, %v331
    %v418 = vadd.f32 %v417, %v332
    %v419 = vadd.f32 %v418, %v333
    %v420 = vadd.f32 %v419, %v334
    %v421 = vadd.f32 %v420, %v335
    %v422 = vrot.slane %v421, 4
    %v423 = vadd.f32 %v421, %v422
    %v424 = vrot.slane %v423, 2
    %v425 = vadd.f32 %v423, %v424
    %v426 = vrot.slane %v425, 1
    %v427 = vadd.f32 %v425, %v426
    %v428 = vadd.f32 %v406, %v427
    %429 = vst [vmem:[#allocation2] sm:$0x1] %v428
    %v430 = vld [vmem:[#allocation4] sm:$0x1]
    %v431 = vmul.f32 %v390, %v390
    %v432 = vmul.f32 %v391, %v391
    %v433 = vmul.f32 %v392, %v392
    %v434 = vmul.f32 %v393, %v393
    %v435 = vmul.f32 %v394, %v394
    %v436 = vmul.f32 %v395, %v395
    %v437 = vmul.f32 %v396, %v396
    %v438 = vmul.f32 %v397, %v397
    %v439 = vmul.f32 %v398, %v398
    %v440 = vmul.f32 %v399, %v399
    %v441 = vmul.f32 %v400, %v400
    %v442 = vmul.f32 %v401, %v401
    %v443 = vmul.f32 %v402, %v402
    %v444 = vmul.f32 %v403, %v403
    %v445 = vmul.f32 %v404, %v404
    %v446 = vmul.f32 %v405, %v405
    %v447 = vadd.f32 %v431, %v432
    %v448 = vadd.f32 %v447, %v433
    %v449 = vadd.f32 %v448, %v434
    %v450 = vadd.f32 %v449, %v435
    %v451 = vadd.f32 %v450, %v436
    %v452 = vadd.f32 %v451, %v437
    %v453 = vadd.f32 %v452, %v438
    %v454 = vadd.f32 %v453, %v439
    %v455 = vadd.f32 %v454, %v440
    %v456 = vadd.f32 %v455, %v441
    %v457 = vadd.f32 %v456, %v442
    %v458 = vadd.f32 %v457, %v443
    %v459 = vadd.f32 %v458, %v444
    %v460 = vadd.f32 %v459, %v445
    %v461 = vadd.f32 %v460, %v446
    %v462 = vrot.slane %v461, 4
    %v463 = vadd.f32 %v461, %v462
    %v464 = vrot.slane %v463, 2
    %v465 = vadd.f32 %v463, %v464
    %v466 = vrot.slane %v465, 1
    %v467 = vadd.f32 %v465, %v466
    %v468 = vadd.f32 %v430, %v467
    %469 = vst [vmem:[#allocation4] sm:$0x1] %v468
    // Predicated region
    $region14: #{tpu_custom_call.1} parent=1 // pred_check
      _
    $region15: #{tpu_custom_call.1} parent=1 // pred_check_branch
      %471 = sbr.rel (0) target = $region17
    $region16: #{tpu_custom_call.1} parent=1 // pred_region
      %s473 = ssub.s32 128, 128
      %474 = vsyncadd [#allocation3], %s473
      %s476 = sshll.u32 [#allocation2], 4
      %s477 = int_to_ptr.vmem [resolvable:$true] %s476
      %479 = dma.vmem_to_hbm [thread:$0]  %s477, 128, %s2, [#allocation3]
    $region17: #{tpu_custom_call.1} parent=1 // pred_fallthru
      _
    // Predicated region
    $region18: #{tpu_custom_call.1} parent=1 // pred_check
      _
    $region19: #{tpu_custom_call.1} parent=1 // pred_check_branch
      %481 = sbr.rel (0) target = $region21
    $region20: #{tpu_custom_call.1} parent=1 // pred_region
      %s483 = ssub.s32 128, 128
      %484 = vsyncadd [#allocation5], %s483
      %s486 = sshll.u32 [#allocation4], 4
      %s487 = int_to_ptr.vmem [resolvable:$true] %s486
      %489 = dma.vmem_to_hbm [thread:$0]  %s487, 128, %s3, [#allocation5]
    $region21: #{tpu_custom_call.1} parent=1 // pred_fallthru
      _
    // Predicated region
    $region22: #{tpu_custom_call.1} parent=1 // pred_check
      _
    $region23: #{tpu_custom_call.1} parent=1 // pred_check_branch
      %491 = sbr.rel (0) target = $region25
    $region24: #{tpu_custom_call.1} parent=1 // pred_region
      %s493 = ssub.s32 128, 128
      %494 = vsyncadd [#allocation5], %s493
      %s496 = sshll.u32 [#allocation6], 4
      %s497 = int_to_ptr.vmem [resolvable:$true] %s496
      %499 = dma.vmem_to_hbm [thread:$0]  %s497, 128, %s4, [#allocation5]
    $region25: #{tpu_custom_call.1} parent=1 // pred_fallthru
      _
    // Predicated region
    $region26: #{tpu_custom_call.1} parent=1 // pred_check
      _
    $region27: #{tpu_custom_call.1} parent=1 // pred_check_branch
      %501 = sbr.rel (0) target = $region29
    $region28: #{tpu_custom_call.1} parent=1 // pred_region
      %502 = dma.done [#allocation3], 128
    $region29: #{tpu_custom_call.1} parent=1 // pred_fallthru
      _
    // Predicated region
    $region30: #{tpu_custom_call.1} parent=1 // pred_check
      _
    $region31: #{tpu_custom_call.1} parent=1 // pred_check_branch
      %504 = sbr.rel (0) target = $region33
    $region32: #{tpu_custom_call.1} parent=1 // pred_region
      %505 = dma.done [#allocation5], 128
    $region33: #{tpu_custom_call.1} parent=1 // pred_fallthru
      _
    // Predicated region
    $region34: #{tpu_custom_call.1} parent=1 // pred_check
      _
    $region35: #{tpu_custom_call.1} parent=1 // pred_check_branch
      %507 = sbr.rel (0) target = $region37
    $region36: #{tpu_custom_call.1} parent=1 // pred_region
      %508 = dma.done [#allocation5], 128
    $region37: #{tpu_custom_call.1} parent=1 // pred_fallthru
      _
    %509 = vsyncpa [#allocation3], 1
    %510 = vsyncpa [#allocation5], 1

</llo_original>
